<compile_context>
chip_gen: v6e
topology: v6e:2x2x1
jax: 0.10.0
libtpu: 0.0.40
codegen_flags: <defaults>
</compile_context>

<pallas_src>
import jax
import jax.numpy as jnp
from jax.experimental import pallas as pl
from jax.experimental.pallas import tpu as pltpu


def _aspp_gemm_kernel(p_ref, w_ref, s_ref, b_ref, o_ref, acc_ref):
    """One grid step = (batch n, spatial tile s, contraction tile k).

    p_ref:   (1, TK, TS)      im2col patch tile (compute dtype)
    w_ref:   (Cout_p, TK)     conv-weight tile (compute dtype)
    s_ref:   (Cout_p, 1)      BN scale (f32, constant across the grid)
    b_ref:   (Cout_p, 1)      BN bias  (f32, constant across the grid)
    o_ref:   (1, Cout_p, TS)  output tile (lane dim = spatial -> lane-dense)
    acc_ref: (Cout_p, TS)     f32 VMEM accumulator, resident across the k axis
    """
    k = pl.program_id(2)

    @pl.when(k == 0)
    def _zero():
        acc_ref[...] = jnp.zeros_like(acc_ref)

    acc_ref[...] += jnp.dot(w_ref[...], p_ref[0],
                            preferred_element_type=jnp.float32)

    @pl.when(k == pl.num_programs(2) - 1)
    def _epilogue():
        # Eval-mode BN (f32 scale/bias) + ReLU, then cast + lane-dense store.
        y = jnp.maximum(acc_ref[...] * s_ref[...] + b_ref[...], 0.0)
        o_ref[0] = y.astype(o_ref.dtype)


def _round_up(x, m):
    return (x + m - 1) // m * m


def _pick_spatial_tile(hw_padded, n_batch, min_steps=8):
    """Largest lane-dense tile (multiple of 128) dividing hw_padded that still
    yields >= min_steps parallel grid steps (2 TCs x pipeline depth)."""
    cands = [t for t in (512, 256, 128) if hw_padded % t == 0]
    for t in cands:
        if n_batch * (hw_padded // t) >= min_steps:
            return t
    return cands[-1]  # 128: maximizes step count among lane-dense divisors


def _pick_k_tile(kc_padded):
    """Contraction tile: deep enough for MXU efficiency, bounded for VMEM."""
    for t in (2048, 1024, 512, 256, 128):
        if kc_padded % t == 0:
            return t
    return 128  # unreachable: kc_padded is always a multiple of 128


def aspp_forward(x_nchw, weight, bn_gamma, bn_beta, bn_mean, bn_var,
                 *, dilation, padding, eps=1e-5, compute_dtype=jnp.bfloat16):
    """Matches _ASPPModule.forward (eval-mode BN).

    x_nchw: (N, Cin, H, W); weight: (Cout, Cin, KH, KW).
    Returns (N, Cout, Ho, Wo) in NCHW, like the PyTorch module.
    """
    N, Cin, H, W = x_nchw.shape
    Cout, _, KH, KW = weight.shape
    Ho = H + 2 * padding - dilation * (KH - 1)
    Wo = W + 2 * padding - dilation * (KW - 1)
    HW = Ho * Wo
    KC = KH * KW * Cin
    out_dtype = x_nchw.dtype
    if compute_dtype is None:
        compute_dtype = out_dtype

    # ---- Alignment / tiling decisions --------------------------------------
    sub = 16 if (jnp.dtype(out_dtype).itemsize < 4
                 or jnp.dtype(compute_dtype).itemsize < 4) else 8
    Cout_p = _round_up(Cout, sub)       # sublane-aligned output rows
    KC_p = _round_up(KC, 128)           # dense contraction depth
    HW_p = _round_up(HW, 128)           # lane-dense spatial axis
    TS = _pick_spatial_tile(HW_p, N)
    TK = _pick_k_tile(KC_p)
    grid = (N, HW_p // TS, KC_p // TK)

    # ---- im2col in compute dtype (cast BEFORE the 9x concat) ---------------
    xc = x_nchw.astype(compute_dtype)
    xp = jnp.pad(xc, ((0, 0), (0, 0), (padding, padding), (padding, padding)))
    taps = [xp[:, :, kh * dilation:kh * dilation + Ho,
                  kw * dilation:kw * dilation + Wo]
            for kh in range(KH) for kw in range(KW)]
    patches = jnp.concatenate(taps, axis=1).reshape(N, KC, HW)
    patches = jnp.pad(patches, ((0, 0), (0, KC_p - KC), (0, HW_p - HW)))

    # ---- Weight (Cout, Cin, KH, KW) -> (Cout_p, KC_p), tap order (kh,kw,cin)
    w2 = jnp.transpose(weight, (0, 2, 3, 1)).reshape(Cout, KC)
    w2 = jnp.pad(w2, ((0, Cout_p - Cout), (0, KC_p - KC))).astype(compute_dtype)

    # ---- Eval-mode BN as per-channel scale/bias, applied in the f32 epilogue
    inv_std = jax.lax.rsqrt(bn_var.astype(jnp.float32) + eps)
    scale = bn_gamma.astype(jnp.float32) * inv_std
    bias = bn_beta.astype(jnp.float32) - bn_mean.astype(jnp.float32) * scale
    scale2 = jnp.pad(scale, (0, Cout_p - Cout)).reshape(Cout_p, 1)
    bias2 = jnp.pad(bias, (0, Cout_p - Cout)).reshape(Cout_p, 1)

    # ---- Scoped VMEM budget for this tiling ---------------------------------
    c_itm = jnp.dtype(compute_dtype).itemsize
    o_itm = jnp.dtype(out_dtype).itemsize
    tile_bytes = (2 * TK * TS * c_itm          # patch tile, double-buffered
                  + 2 * Cout_p * TK * c_itm    # weight tile, double-buffered
                  + 2 * Cout_p * TS * o_itm    # output tile, double-buffered
                  + Cout_p * TS * 4            # f32 accumulator scratch
                  + 4 * Cout_p * 4)            # scale + bias
    vmem_limit = int(min(64 << 20, max(2 * tile_bytes, 8 << 20)))

    def _call(single_buffer_consts):
        if single_buffer_consts:
            def const_spec(shape):
                return pl.BlockSpec(shape, lambda n, s, k: (0, 0),
                                    pipeline_mode=pl.Buffered(1))
        else:
            def const_spec(shape):
                return pl.BlockSpec(shape, lambda n, s, k: (0, 0))

        return pl.pallas_call(
            _aspp_gemm_kernel,
            out_shape=jax.ShapeDtypeStruct((N, Cout_p, HW_p), out_dtype),
            grid_spec=pltpu.PrefetchScalarGridSpec(
                num_scalar_prefetch=0,
                grid=grid,
                in_specs=[
                    pl.BlockSpec((1, TK, TS), lambda n, s, k: (n, k, s)),
                    pl.BlockSpec((Cout_p, TK), lambda n, s, k: (0, k)),
                    const_spec((Cout_p, 1)),
                    const_spec((Cout_p, 1)),
                ],
                out_specs=pl.BlockSpec((1, Cout_p, TS),
                                       lambda n, s, k: (n, 0, s)),
                scratch_shapes=[pltpu.VMEM((Cout_p, TS), jnp.float32)],
            ),
            compiler_params=pltpu.CompilerParams(
                dimension_semantics=("parallel", "parallel", "arbitrary"),
                vmem_limit_bytes=vmem_limit),
        )(patches, w2, scale2, bias2)

    try:
        out = _call(True)
    except Exception:
        # pipeline_mode=pl.Buffered(1) unsupported on this build; the constant
        # operands are tiny, so default double-buffering is an acceptable fallback.
        out = _call(False)

    # Drop Cout / spatial padding (padded spatial cols are ReLU(bias) != 0).
    return out[:, :Cout, :HW].reshape(N, Cout, Ho, Wo)


def _reference(x_nchw, weight, bn_gamma, bn_beta, bn_mean, bn_var,
               *, dilation, padding, eps=1e-5):
    """Pure-JAX reference: dilated conv (NCHW) + eval-mode BN + ReLU."""
    y = jax.lax.conv_general_dilated(
        x_nchw, weight,
        window_strides=(1, 1),
        padding=((padding, padding), (padding, padding)),
        rhs_dilation=(dilation, dilation),
        dimension_numbers=("NCHW", "OIHW", "NCHW"),
    )
    g = bn_gamma.reshape(1, -1, 1, 1)
    b = bn_beta.reshape(1, -1, 1, 1)
    m = bn_mean.reshape(1, -1, 1, 1)
    v = bn_var.reshape(1, -1, 1, 1)
    y = (y - m) / jnp.sqrt(v + eps) * g + b
    return jnp.maximum(y, 0.0)


if __name__ == "__main__":
    # _ASPPModule(inplanes=4, planes=8, kernel_size=3, padding=2, dilation=2, BatchNorm)
    N, Cin, H, W = 2, 4, 16, 16
    Cout, K, dil, pad = 8, 3, 2, 2

    key = jax.random.PRNGKey(0)
    kx, kw = jax.random.split(key)

    x = jax.random.normal(kx, (N, Cin, H, W), dtype=jnp.float32)

    # kaiming_normal_: std = sqrt(2 / fan_in), fan_in = Cin * K * K.
    fan_in = Cin * K * K
    weight = jax.random.normal(kw, (Cout, Cin, K, K), dtype=jnp.float32) * jnp.sqrt(2.0 / fan_in)

    # BatchNorm params per _init_weight: gamma=1, beta=0; running stats mean=0, var=1.
    bn_gamma = jnp.ones((Cout,), jnp.float32)
    bn_beta = jnp.zeros((Cout,), jnp.float32)
    bn_mean = jnp.zeros((Cout,), jnp.float32)
    bn_var = jnp.ones((Cout,), jnp.float32)

    ref = _reference(x, weight, bn_gamma, bn_beta, bn_mean, bn_var,
                     dilation=dil, padding=pad)

    # f32 compute path (tight tolerance vs the reference).
    out_f32 = aspp_forward(x, weight, bn_gamma, bn_beta, bn_mean, bn_var,
                           dilation=dil, padding=pad,
                           compute_dtype=jnp.float32)
    out_f32 = jax.block_until_ready(out_f32)
    assert out_f32.shape == (N, Cout, H, W), out_f32.shape
    assert jnp.allclose(out_f32, ref, atol=1e-4, rtol=1e-4), \
        float(jnp.max(jnp.abs(out_f32 - ref)))

    # Default bf16 MXU path (f32 accumulation, f32 BN epilogue); looser tolerance
    # for bf16 input/weight rounding.
    out_bf16 = aspp_forward(x, weight, bn_gamma, bn_beta, bn_mean, bn_var,
                            dilation=dil, padding=pad)
    out_bf16 = jax.block_until_ready(out_bf16)
    assert out_bf16.shape == (N, Cout, H, W), out_bf16.shape
    assert jnp.allclose(out_bf16, ref, atol=0.25, rtol=0.25), \
        float(jnp.max(jnp.abs(out_bf16 - ref)))

    print("KERNEL_OK")
</pallas_src>

<mosaic_0001>
module attributes {stable_mosaic.version = 11 : i64} {
  func.func @_aspp_gemm_kernel(%arg0: i32, %arg1: i32, %arg2: i32, %arg3: memref<1x128x128xf32, #tpu.memory_space<vmem>>, %arg4: memref<8x128xf32, #tpu.memory_space<vmem>>, %arg5: memref<8x1xf32, #tpu.memory_space<vmem>>, %arg6: memref<8x1xf32, #tpu.memory_space<vmem>>, %arg7: memref<1x8x128xf32, #tpu.memory_space<vmem>>, %arg8: memref<8x128xf32, #tpu.memory_space<vmem>>) attributes {dimension_semantics = [#tpu.dimension_semantics<parallel>, #tpu.dimension_semantics<parallel>, #tpu.dimension_semantics<arbitrary>], iteration_bounds = array<i64: 2, 2, 1>, scalar_prefetch = 0 : i64, scratch_operands = 1 : i64, tpu.core_type = #tpu.core_type<tc>, window_params = [{transform_indices = @transform_0, window_bounds = array<i64: 1, 128, 128>}, {transform_indices = @transform_1, window_bounds = array<i64: 8, 128>}, {pipeline_mode = #tpu.pipeline_mode<synchronous>, transform_indices = @transform_2, window_bounds = array<i64: 8, 1>}, {pipeline_mode = #tpu.pipeline_mode<synchronous>, transform_indices = @transform_3, window_bounds = array<i64: 8, 1>}, {transform_indices = @transform_4, window_bounds = array<i64: 1, 8, 128>}]} {
    %c0_i32 = arith.constant 0 : i32
    %0 = arith.cmpi eq, %arg2, %c0_i32 : i32
    %1 = arith.extui %0 : i1 to i32
    %c0_i32_0 = arith.constant 0 : i32
    %2 = arith.cmpi ne, %1, %c0_i32_0 : i32
    scf.if %2 {
      %cst_11 = arith.constant 0.000000e+00 : f32
      %13 = vector.broadcast %cst_11 : f32 to vector<8x128xf32>
      %c0_12 = arith.constant 0 : index
      %c0_13 = arith.constant 0 : index
      %14 = vector.load %arg8[%c0_12, %c0_13] : memref<8x128xf32, #tpu.memory_space<vmem>>, vector<8x128xf32>
      tpu.vector_store %arg8[%c0_12, %c0_13], %13 {strides = array<i32>} : memref<8x128xf32, #tpu.memory_space<vmem>>, vector<8x128xf32>,
    } else {
    }
    %c0 = arith.constant 0 : index
    %c0_1 = arith.constant 0 : index
    %3 = vector.load %arg8[%c0, %c0_1] : memref<8x128xf32, #tpu.memory_space<vmem>>, vector<8x128xf32>
    %c0_2 = arith.constant 0 : index
    %c0_3 = arith.constant 0 : index
    %4 = vector.load %arg4[%c0_2, %c0_3] : memref<8x128xf32, #tpu.memory_space<vmem>>, vector<8x128xf32>
    %c0_4 = arith.constant 0 : index
    %c0_5 = arith.constant 0 : index
    %c0_6 = arith.constant 0 : index
    %5 = vector.load %arg3[%c0_4, %c0_5, %c0_6] : memref<1x128x128xf32, #tpu.memory_space<vmem>>, vector<1x128x128xf32>
    %6 = vector.shape_cast %5 : vector<1x128x128xf32> to vector<128x128xf32>
    %cst = arith.constant dense<0.000000e+00> : vector<8x128xf32>
    %7 = tpu.matmul %4, %6, %cst {dimension_numbers = #tpu.dot_dimension_numbers<[1], [0], [0], [1], [0, 0, 1, 1], [], []>} : vector<8x128xf32>, vector<128x128xf32>, vector<8x128xf32> -> vector<8x128xf32>
    %8 = arith.addf %3, %7 : vector<8x128xf32>
    %c0_7 = arith.constant 0 : index
    %c0_8 = arith.constant 0 : index
    %9 = vector.load %arg8[%c0_7, %c0_8] : memref<8x128xf32, #tpu.memory_space<vmem>>, vector<8x128xf32>
    tpu.vector_store %arg8[%c0_7, %c0_8], %8 {strides = array<i32>} : memref<8x128xf32, #tpu.memory_space<vmem>>, vector<8x128xf32>,
    %c0_i32_9 = arith.constant 0 : i32
    %10 = arith.cmpi eq, %arg2, %c0_i32_9 : i32
    %11 = arith.extui %10 : i1 to i32
    %c0_i32_10 = arith.constant 0 : i32
    %12 = arith.cmpi ne, %11, %c0_i32_10 : i32
    scf.if %12 {
      %c0_11 = arith.constant 0 : index
      %c0_12 = arith.constant 0 : index
      %13 = vector.load %arg8[%c0_11, %c0_12] : memref<8x128xf32, #tpu.memory_space<vmem>>, vector<8x128xf32>
      %c0_13 = arith.constant 0 : index
      %c0_14 = arith.constant 0 : index
      %14 = vector.load %arg5[%c0_13, %c0_14] : memref<8x1xf32, #tpu.memory_space<vmem>>, vector<8x1xf32>
      %15 = vector.broadcast %14 : vector<8x1xf32> to vector<8x128xf32>
      %16 = arith.mulf %13, %15 : vector<8x128xf32>
      %c0_15 = arith.constant 0 : index
      %c0_16 = arith.constant 0 : index
      %17 = vector.load %arg6[%c0_15, %c0_16] : memref<8x1xf32, #tpu.memory_space<vmem>>, vector<8x1xf32>
      %18 = vector.broadcast %17 : vector<8x1xf32> to vector<8x128xf32>
      %19 = arith.addf %16, %18 : vector<8x128xf32>
      %cst_17 = arith.constant 0.000000e+00 : f32
      %20 = vector.broadcast %cst_17 : f32 to vector<8x128xf32>
      %21 = arith.maximumf %19, %20 : vector<8x128xf32>
      %c0_18 = arith.constant 0 : index
      %c0_19 = arith.constant 0 : index
      %c0_20 = arith.constant 0 : index
      %22 = vector.load %arg7[%c0_18, %c0_19, %c0_20] : memref<1x8x128xf32, #tpu.memory_space<vmem>>, vector<1x8x128xf32>
      %23 = vector.shape_cast %22 : vector<1x8x128xf32> to vector<8x128xf32>
      %24 = vector.shape_cast %21 : vector<8x128xf32> to vector<1x8x128xf32>
      tpu.vector_store %arg7[%c0_18, %c0_19, %c0_20], %24 {strides = array<i32>} : memref<1x8x128xf32, #tpu.memory_space<vmem>>, vector<1x8x128xf32>,
    } else {
    }
    return
  }
  func.func @transform_0(%arg0: i32, %arg1: i32, %arg2: i32) -> (i32, i32, i32) {
    %c0_i32 = arith.constant 0 : i32
    return %arg0, %arg2, %arg1 : i32, i32, i32
  }
  func.func @transform_1(%arg0: i32, %arg1: i32, %arg2: i32) -> (i32, i32) {
    %c0_i32 = arith.constant 0 : i32
    %c0_i32_0 = arith.constant 0 : i32
    return %c0_i32, %arg2 : i32, i32
  }
  func.func @transform_2(%arg0: i32, %arg1: i32, %arg2: i32) -> (i32, i32) {
    %c0_i32 = arith.constant 0 : i32
    %c0_i32_0 = arith.constant 0 : i32
    %c0_i32_1 = arith.constant 0 : i32
    return %c0_i32, %c0_i32_0 : i32, i32
  }
  func.func @transform_3(%arg0: i32, %arg1: i32, %arg2: i32) -> (i32, i32) {
    %c0_i32 = arith.constant 0 : i32
    %c0_i32_0 = arith.constant 0 : i32
    %c0_i32_1 = arith.constant 0 : i32
    return %c0_i32, %c0_i32_0 : i32, i32
  }
  func.func @transform_4(%arg0: i32, %arg1: i32, %arg2: i32) -> (i32, i32, i32) {
    %c0_i32 = arith.constant 0 : i32
    %c0_i32_0 = arith.constant 0 : i32
    return %arg0, %c0_i32, %arg1 : i32, i32, i32
  }
}

module attributes {stable_mosaic.version = 11 : i64} {
  func.func @_aspp_gemm_kernel(%arg0: i32, %arg1: i32, %arg2: i32, %arg3: memref<1x128x128xf32, #tpu.memory_space<vmem>>, %arg4: memref<8x128xf32, #tpu.memory_space<vmem>>, %arg5: memref<8x1xf32, #tpu.memory_space<vmem>>, %arg6: memref<8x1xf32, #tpu.memory_space<vmem>>, %arg7: memref<1x8x128xf32, #tpu.memory_space<vmem>>, %arg8: memref<8x128xf32, #tpu.memory_space<vmem>>) attributes {dimension_semantics = [#tpu.dimension_semantics<parallel>, #tpu.dimension_semantics<parallel>, #tpu.dimension_semantics<arbitrary>], iteration_bounds = array<i64: 2, 2, 1>, scalar_prefetch = 0 : i64, scratch_operands = 1 : i64, tpu.core_type = #tpu.core_type<tc>, window_params = [{transform_indices = @transform_0, window_bounds = array<i64: 1, 128, 128>}, {transform_indices = @transform_1, window_bounds = array<i64: 8, 128>}, {pipeline_mode = #tpu.pipeline_mode<synchronous>, transform_indices = @transform_2, window_bounds = array<i64: 8, 1>}, {pipeline_mode = #tpu.pipeline_mode<synchronous>, transform_indices = @transform_3, window_bounds = array<i64: 8, 1>}, {transform_indices = @transform_4, window_bounds = array<i64: 1, 8, 128>}]} {
    %c0_i32 = arith.constant 0 : i32
    %0 = arith.cmpi eq, %arg2, %c0_i32 : i32
    %1 = arith.extui %0 : i1 to i32
    %c0_i32_0 = arith.constant 0 : i32
    %2 = arith.cmpi ne, %1, %c0_i32_0 : i32
    scf.if %2 {
      %cst_11 = arith.constant 0.000000e+00 : f32
      %13 = vector.broadcast %cst_11 : f32 to vector<8x128xf32>
      %c0_12 = arith.constant 0 : index
      %c0_13 = arith.constant 0 : index
      %14 = vector.load %arg8[%c0_12, %c0_13] : memref<8x128xf32, #tpu.memory_space<vmem>>, vector<8x128xf32>
      tpu.vector_store %arg8[%c0_12, %c0_13], %13 {strides = array<i32>} : memref<8x128xf32, #tpu.memory_space<vmem>>, vector<8x128xf32>,
    } else {
    }
    %c0 = arith.constant 0 : index
    %c0_1 = arith.constant 0 : index
    %3 = vector.load %arg8[%c0, %c0_1] : memref<8x128xf32, #tpu.memory_space<vmem>>, vector<8x128xf32>
    %c0_2 = arith.constant 0 : index
    %c0_3 = arith.constant 0 : index
    %4 = vector.load %arg4[%c0_2, %c0_3] : memref<8x128xf32, #tpu.memory_space<vmem>>, vector<8x128xf32>
    %c0_4 = arith.constant 0 : index
    %c0_5 = arith.constant 0 : index
    %c0_6 = arith.constant 0 : index
    %5 = vector.load %arg3[%c0_4, %c0_5, %c0_6] : memref<1x128x128xf32, #tpu.memory_space<vmem>>, vector<1x128x128xf32>
    %6 = vector.shape_cast %5 : vector<1x128x128xf32> to vector<128x128xf32>
    %cst = arith.constant dense<0.000000e+00> : vector<8x128xf32>
    %7 = tpu.matmul %4, %6, %cst {dimension_numbers = #tpu.dot_dimension_numbers<[1], [0], [0], [1], [0, 0, 1, 1], [], []>} : vector<8x128xf32>, vector<128x128xf32>, vector<8x128xf32> -> vector<8x128xf32>
    %8 = arith.addf %3, %7 : vector<8x128xf32>
    %c0_7 = arith.constant 0 : index
    %c0_8 = arith.constant 0 : index
    %9 = vector.load %arg8[%c0_7, %c0_8] : memref<8x128xf32, #tpu.memory_space<vmem>>, vector<8x128xf32>
    tpu.vector_store %arg8[%c0_7, %c0_8], %8 {strides = array<i32>} : memref<8x128xf32, #tpu.memory_space<vmem>>, vector<8x128xf32>,
    %c0_i32_9 = arith.constant 0 : i32
    %10 = arith.cmpi eq, %arg2, %c0_i32_9 : i32
    %11 = arith.extui %10 : i1 to i32
    %c0_i32_10 = arith.constant 0 : i32
    %12 = arith.cmpi ne, %11, %c0_i32_10 : i32
    scf.if %12 {
      %c0_11 = arith.constant 0 : index
      %c0_12 = arith.constant 0 : index
      %13 = vector.load %arg8[%c0_11, %c0_12] : memref<8x128xf32, #tpu.memory_space<vmem>>, vector<8x128xf32>
      %c0_13 = arith.constant 0 : index
      %c0_14 = arith.constant 0 : index
      %14 = vector.load %arg5[%c0_13, %c0_14] : memref<8x1xf32, #tpu.memory_space<vmem>>, vector<8x1xf32>
      %15 = vector.broadcast %14 : vector<8x1xf32> to vector<8x128xf32>
      %16 = arith.mulf %13, %15 : vector<8x128xf32>
      %c0_15 = arith.constant 0 : index
      %c0_16 = arith.constant 0 : index
      %17 = vector.load %arg6[%c0_15, %c0_16] : memref<8x1xf32, #tpu.memory_space<vmem>>, vector<8x1xf32>
      %18 = vector.broadcast %17 : vector<8x1xf32> to vector<8x128xf32>
      %19 = arith.addf %16, %18 : vector<8x128xf32>
      %cst_17 = arith.constant 0.000000e+00 : f32
      %20 = vector.broadcast %cst_17 : f32 to vector<8x128xf32>
      %21 = arith.maximumf %19, %20 : vector<8x128xf32>
      %c0_18 = arith.constant 0 : index
      %c0_19 = arith.constant 0 : index
      %c0_20 = arith.constant 0 : index
      %22 = vector.load %arg7[%c0_18, %c0_19, %c0_20] : memref<1x8x128xf32, #tpu.memory_space<vmem>>, vector<1x8x128xf32>
      %23 = vector.shape_cast %22 : vector<1x8x128xf32> to vector<8x128xf32>
      %24 = vector.shape_cast %21 : vector<8x128xf32> to vector<1x8x128xf32>
      tpu.vector_store %arg7[%c0_18, %c0_19, %c0_20], %24 {strides = array<i32>} : memref<1x8x128xf32, #tpu.memory_space<vmem>>, vector<1x8x128xf32>,
    } else {
    }
    return
  }
  func.func @transform_0(%arg0: i32, %arg1: i32, %arg2: i32) -> (i32, i32, i32) {
    %c0_i32 = arith.constant 0 : i32
    return %arg0, %arg2, %arg1 : i32, i32, i32
  }
  func.func @transform_1(%arg0: i32, %arg1: i32, %arg2: i32) -> (i32, i32) {
    %c0_i32 = arith.constant 0 : i32
    %c0_i32_0 = arith.constant 0 : i32
    return %c0_i32, %arg2 : i32, i32
  }
  func.func @transform_2(%arg0: i32, %arg1: i32, %arg2: i32) -> (i32, i32) {
    %c0_i32 = arith.constant 0 : i32
    %c0_i32_0 = arith.constant 0 : i32
    %c0_i32_1 = arith.constant 0 : i32
    return %c0_i32, %c0_i32_0 : i32, i32
  }
  func.func @transform_3(%arg0: i32, %arg1: i32, %arg2: i32) -> (i32, i32) {
    %c0_i32 = arith.constant 0 : i32
    %c0_i32_0 = arith.constant 0 : i32
    %c0_i32_1 = arith.constant 0 : i32
    return %c0_i32, %c0_i32_0 : i32, i32
  }
  func.func @transform_4(%arg0: i32, %arg1: i32, %arg2: i32) -> (i32, i32, i32) {
    %c0_i32 = arith.constant 0 : i32
    %c0_i32_0 = arith.constant 0 : i32
    return %arg0, %c0_i32, %arg1 : i32, i32, i32
  }
}

</mosaic_0001>

<llo_original>
// kernel: tpu_custom_call.1
$region0: #{tpu_custom_call.1}
  #allocation0 [shape = 'u32[]', space=smem, size = 0x4, offset = 0x4, fixed_abs, tag = 'smem constant byte address 0x4 - core index']
  #allocation1 [shape = 'u32[144,128]{1,0:T(1,128)}', space=vmem, size = 0x12000, scoped, tag = 'internal scratch']
  #allocation2 [shape = 'f32[8,128]{1,0:T(8,128)}', space=vmem, size = 0x1000, scoped, tag = 'scratch operand']
  %s0 = inlined_call_operand.hbm [shape: f32[2,128,256], index: 0, kind: input, shape index: {}]
  %s1 = inlined_call_operand.vmem [shape: f32[8,128], index: 1, kind: input, shape index: {}]
  %s2 = inlined_call_operand.vmem [shape: f32[8,1], index: 2, kind: input, shape index: {}]
  %s3 = inlined_call_operand.vmem [shape: f32[8,1], index: 3, kind: input, shape index: {}]
  %s4 = inlined_call_operand.hbm [shape: f32[2,8,256], index: 4, kind: output, shape index: {}]
  %s5 = sld [smem:[#allocation0]]
  $region61: #{tpu_custom_call.1} parent=0
    _
  %s7 = ssub.s32 1, %s5
  %s8 = scalar_select 0, %s7, %s5
  $region1: #{tpu_custom_call.1} parent=0
    #allocation3 [shape = 'u8[131072]{0}', space=vmem, size = 0x20000, scoped, tag = 'input window, operand 0']
    #allocation4 [shape = 's32[2]{0}', space=sflag, size = 0x8, scoped, tag = 'scoped memory for tpu_custom_call.1']
    #allocation5 [shape = 's32[2]{0}', space=sflag, size = 0x8, scoped, tag = 'scoped memory for tpu_custom_call.1']
    #allocation6 [shape = 'u8[8192]{0}', space=vmem, size = 0x2000, scoped, tag = 'output window, operand 0']
    %9 = vsyncpa [#allocation4], 0
    %s10 = scalar_lea.sflag [#allocation4], 1
    %11 = vsyncpa %s10, 0
    %12 = vsyncpa [#allocation5], 0
    %s13 = scalar_lea.sflag [#allocation5], 1
    %14 = vsyncpa %s13, 0
    loop: start=0, step=1, limit=6
    $region2: #{tpu_custom_call.1} parent=1 // loop_pre_header
      _
    $region3: #{tpu_custom_call.1} parent=1 // loop_header
      %s16 = sphi 0, %s20
      %p17 = scmp.ge.s32.totalorder %s16, 6
      %s23 = sphi 0, %s42
      %s24 = sphi 0, %s38
      %s25 = sphi 0, %s34
      %s26 = sphi 0, %s23
      %s27 = sphi 0, %s24
      %s28 = sphi 0, %s25
      %s29 = sphi 0, %s26
      %s30 = sphi 0, %s27
      %s31 = sphi 0, %s28
      %s49 = sphi 0, %s51
      %s52 = sphi 0, %s49
      %s53 = sphi 0, %s52
      %s69 = sphi 0, %s53
      %s75 = sphi 0, %s77
      %s78 = sphi 0, %s75
      %s79 = sphi 0, %s78
      %s95 = sphi 0, %s79
      %s99 = sphi 0, %s99
      %s101 = sphi 0, %s99
      %s102 = sphi 0, %s101
      %s116 = sphi 0, %s102
      %s120 = sphi 0, %s120
      %s122 = sphi 0, %s120
      %s123 = sphi 0, %s122
      %s137 = sphi 0, %s123
      %s145 = sphi 0, %s147
      %s148 = sphi 0, %s145
      %s149 = sphi 0, %s148
      %s165 = sphi 0, %s149
    $region4: #{tpu_custom_call.1} parent=1 // loop_header_branch
      %19 = sbr.rel (%p17) target = $region8
    $region5: #{tpu_custom_call.1} parent=1 // loop_body
      %s21 = ssub.s32 %s16, 1
      %s22 = ssub.s32 %s16, 2
      %s32 = sadd.s32 1, %s25
      %p33 = scmp.ge.s32.totalorder %s32, 1
      %s34 = scalar_select %p33, 0, %s32
      %s35 = sadd.s32 1, %s24
      %s36 = scalar_select %p33, %s35, %s24
      %p37 = scmp.ge.s32.totalorder %s36, 2
      %s38 = scalar_select %p37, 0, %s36
      %s39 = sadd.s32 1, %s23
      %s40 = scalar_select %p37, %s39, %s23
      %p41 = scmp.ge.s32.totalorder %s40, 2
      %s42 = scalar_select %p41, 0, %s40
      %s43 = ssub.s32 %s23, %s42
      %s44 = ssub.s32 %s25, %s34
      %s45 = sor.u32 %s43, %s44
      %s46 = ssub.s32 %s24, %s38
      %s47 = sor.u32 %s45, %s46
      %p48 = scmp.eq.s32.totalorder %s47, 0
      %s50 = sadd.s32 %s49, 1
      %s51 = scalar_select %p48, %s49, %s50
      %p54 = pneg %p48
      %p55 = scmp.eq.s32.totalorder %s16, 3
      %p56 = por %p54, %p55
      %p57 = scmp.ne.s32.totalorder %s49, %s52
      %p58 = scmp.eq.s32.totalorder %s16, 0
      %p59 = por %p57, %p58
      %p60 = scmp.ne.s32.totalorder %s49, %s52
      %p61 = scmp.eq.s32.totalorder %s21, 3
      %p62 = por %p60, %p61
      %p63 = scmp.ne.s32.totalorder %s52, %s53
      %p64 = scmp.eq.s32.totalorder %s21, 0
      %p65 = por %p63, %p64
      %p66 = scmp.ne.s32.totalorder %s52, %s53
      %p67 = scmp.eq.s32.totalorder %s22, 3
      %p68 = por %p66, %p67
      %p70 = scmp.ne.s32.totalorder %s53, %s69
      %p71 = scmp.eq.s32.totalorder %s22, 0
      %p72 = por %p70, %p71
      %s73 = ssub.s32 %s25, %s34
      %p74 = scmp.eq.s32.totalorder %s73, 0
      %s76 = sadd.s32 %s75, 1
      %s77 = scalar_select %p74, %s75, %s76
      %p80 = pneg %p74
      %p81 = scmp.eq.s32.totalorder %s16, 3
      %p82 = por %p80, %p81
      %p83 = scmp.ne.s32.totalorder %s75, %s78
      %p84 = scmp.eq.s32.totalorder %s16, 0
      %p85 = por %p83, %p84
      %p86 = scmp.ne.s32.totalorder %s75, %s78
      %p87 = scmp.eq.s32.totalorder %s21, 3
      %p88 = por %p86, %p87
      %p89 = scmp.ne.s32.totalorder %s78, %s79
      %p90 = scmp.eq.s32.totalorder %s21, 0
      %p91 = por %p89, %p90
      %p92 = scmp.ne.s32.totalorder %s78, %s79
      %p93 = scmp.eq.s32.totalorder %s22, 3
      %p94 = por %p92, %p93
      %p96 = scmp.ne.s32.totalorder %s79, %s95
      %p97 = scmp.eq.s32.totalorder %s22, 0
      %p98 = por %p96, %p97
      %s100 = sadd.s32 %s99, 1
      %p103 = scmp.eq.s32.totalorder %s16, 3
      %p104 = scmp.ne.s32.totalorder %s99, %s101
      %p105 = scmp.eq.s32.totalorder %s16, 0
      %p106 = por %p104, %p105
      %p107 = scmp.ne.s32.totalorder %s99, %s101
      %p108 = scmp.eq.s32.totalorder %s21, 3
      %p109 = por %p107, %p108
      %p110 = scmp.ne.s32.totalorder %s101, %s102
      %p111 = scmp.eq.s32.totalorder %s21, 0
      %p112 = por %p110, %p111
      %p113 = scmp.ne.s32.totalorder %s101, %s102
      %p114 = scmp.eq.s32.totalorder %s22, 3
      %p115 = por %p113, %p114
      %p117 = scmp.ne.s32.totalorder %s102, %s116
      %p118 = scmp.eq.s32.totalorder %s22, 0
      %p119 = por %p117, %p118
      %s121 = sadd.s32 %s120, 1
      %p124 = scmp.eq.s32.totalorder %s16, 3
      %p125 = scmp.ne.s32.totalorder %s120, %s122
      %p126 = scmp.eq.s32.totalorder %s16, 0
      %p127 = por %p125, %p126
      %p128 = scmp.ne.s32.totalorder %s120, %s122
      %p129 = scmp.eq.s32.totalorder %s21, 3
      %p130 = por %p128, %p129
      %p131 = scmp.ne.s32.totalorder %s122, %s123
      %p132 = scmp.eq.s32.totalorder %s21, 0
      %p133 = por %p131, %p132
      %p134 = scmp.ne.s32.totalorder %s122, %s123
      %p135 = scmp.eq.s32.totalorder %s22, 3
      %p136 = por %p134, %p135
      %p138 = scmp.ne.s32.totalorder %s123, %s137
      %p139 = scmp.eq.s32.totalorder %s22, 0
      %p140 = por %p138, %p139
      %s141 = ssub.s32 %s23, %s42
      %s142 = ssub.s32 %s24, %s38
      %s143 = sor.u32 %s141, %s142
      %p144 = scmp.eq.s32.totalorder %s143, 0
      %s146 = sadd.s32 %s145, 1
      %s147 = scalar_select %p144, %s145, %s146
      %p150 = pneg %p144
      %p151 = scmp.eq.s32.totalorder %s16, 3
      %p152 = por %p150, %p151
      %p153 = scmp.ne.s32.totalorder %s145, %s148
      %p154 = scmp.eq.s32.totalorder %s16, 0
      %p155 = por %p153, %p154
      %p156 = scmp.ne.s32.totalorder %s145, %s148
      %p157 = scmp.eq.s32.totalorder %s21, 3
      %p158 = por %p156, %p157
      %p159 = scmp.ne.s32.totalorder %s148, %s149
      %p160 = scmp.eq.s32.totalorder %s21, 0
      %p161 = por %p159, %p160
      %p162 = scmp.ne.s32.totalorder %s148, %s149
      %p163 = scmp.eq.s32.totalorder %s22, 3
      %p164 = por %p162, %p163
      %p166 = scmp.ne.s32.totalorder %s149, %s165
      %p167 = scmp.eq.s32.totalorder %s22, 0
      %p168 = por %p166, %p167
      %p169 = scmp.le.s32.totalorder 1, %s16
      %p170 = scmp.lt.s32.totalorder %s16, 5
      %p171 = pnand %p169, %p170
      %p172 = pneg %p171
      // Predicated region
      $region9: #{tpu_custom_call.1} parent=5 // pred_check
        _
      $region10: #{tpu_custom_call.1} parent=5 // pred_check_branch
        %174 = sbr.rel (%p171) target = $region12
      $region11: #{tpu_custom_call.1} parent=5 // pred_region
        %s175 = ssub.s32 %s16, 1
        // Predicated region
        $region13: #{tpu_custom_call.1} parent=11 // pred_check
          %p176 = pneg %p91
        $region14: #{tpu_custom_call.1} parent=11 // pred_check_branch
          %178 = sbr.rel (%p176) target = $region16
        $region15: #{tpu_custom_call.1} parent=11 // pred_region
          %p179 = scmp.lt.s32.totalorder %s28, 0
          %s180 = scalar_select %p179, %s28, 0
          %s181 = smul.addr %s180, 8
          %s182 = scalar_lea.vmem %s1, %s181
        $region16: #{tpu_custom_call.1} parent=11 // pred_fallthru
          _
        // Predicated region
        $region17: #{tpu_custom_call.1} parent=11 // pred_check
          %p183 = pneg %p112
        $region18: #{tpu_custom_call.1} parent=11 // pred_check_branch
          %185 = sbr.rel (%p183) target = $region20
        $region19: #{tpu_custom_call.1} parent=11 // pred_region
          _
        $region20: #{tpu_custom_call.1} parent=11 // pred_fallthru
          _
        // Predicated region
        $region21: #{tpu_custom_call.1} parent=11 // pred_check
          %p186 = pneg %p133
        $region22: #{tpu_custom_call.1} parent=11 // pred_check_branch
          %188 = sbr.rel (%p186) target = $region24
        $region23: #{tpu_custom_call.1} parent=11 // pred_region
          _
        $region24: #{tpu_custom_call.1} parent=11 // pred_fallthru
          _
      $region12: #{tpu_custom_call.1} parent=5 // pred_fallthru
        _
      %p189 = scmp.lt.s32.totalorder %s16, 4
      // Predicated region
      $region25: #{tpu_custom_call.1} parent=5 // pred_check
        %p190 = pneg %p189
      $region26: #{tpu_custom_call.1} parent=5 // pred_check_branch
        %192 = sbr.rel (%p190) target = $region28
      $region27: #{tpu_custom_call.1} parent=5 // pred_region
        // Predicated region
        $region29: #{tpu_custom_call.1} parent=27 // pred_check
          %p193 = pneg %p59
        $region30: #{tpu_custom_call.1} parent=27 // pred_check_branch
          %195 = sbr.rel (%p193) target = $region32
        $region31: #{tpu_custom_call.1} parent=27 // pred_region
          %s196 = sand.u32 %s49, 1
          %s197 = scalar_lea.sflag [#allocation4], %s196
          %s198 = sand.u32 %s49, 1
          %s199 = smul.addr %s198, 128
          %s200 = scalar_lea.vmem [#allocation3], %s199
          %s201 = smul.u32 16, %s25
          %s203 = ssub.s32 2048, 2048
          %204 = vsyncadd %s197, %s203
          %s205 = smul.addr %s201, 2
          %s206 = sadd.s32 %s24, %s205
          %s207 = smul.addr %s23, 32
          %s208 = sadd.s32 %s206, %s207
          %s209 = smul.addr %s208, 128
          %s210 = scalar_lea.hbm %s0, %s209
          %s211 = sshll.u32 %s200, 4
          %s212 = int_to_ptr.vmem [resolvable:$true] %s211
          %217 = dma.hbm_to_vmem [thread:$0]  %s210, 2048, %s212, %s197, 256, 128, 8
        $region32: #{tpu_custom_call.1} parent=27 // pred_fallthru
          _
      $region28: #{tpu_custom_call.1} parent=5 // pred_fallthru
        _
      %p218 = scmp.le.s32.totalorder 1, %s16
      %p219 = scmp.lt.s32.totalorder %s16, 5
      %p220 = pnand %p218, %p219
      %p221 = pneg %p220
      // Predicated region
      $region33: #{tpu_custom_call.1} parent=5 // pred_check
        _
      $region34: #{tpu_custom_call.1} parent=5 // pred_check_branch
        %223 = sbr.rel (%p220) target = $region36
      $region35: #{tpu_custom_call.1} parent=5 // pred_region
        %s224 = ssub.s32 %s16, 1
        %s225 = sand.u32 %s52, 1
        %s226 = scalar_lea.sflag [#allocation4], %s225
        %s227 = sand.u32 %s52, 1
        %s228 = smul.addr %s227, 128
        %s229 = scalar_lea.vmem [#allocation3], %s228
        // Predicated region
        $region37: #{tpu_custom_call.1} parent=35 // pred_check
          %p230 = pneg %p65
        $region38: #{tpu_custom_call.1} parent=35 // pred_check_branch
          %232 = sbr.rel (%p230) target = $region40
        $region39: #{tpu_custom_call.1} parent=35 // pred_region
          %233 = dma.done %s226, 2048
        $region40: #{tpu_custom_call.1} parent=35 // pred_fallthru
          _
        %s234 = sand.u32 %s52, 1
        %s235 = scalar_lea.sflag [#allocation4], %s234
        %s236 = sand.u32 %s52, 1
        %s237 = smul.addr %s236, 128
        %s238 = scalar_lea.vmem [#allocation3], %s237
        %p239 = pneg %p65
        %p240 = pneg %p62
        %p241 = scmp.lt.s32.totalorder %s28, 0
        %s242 = scalar_select %p241, %s28, 0
        %s243 = smul.addr %s242, 8
        %s244 = scalar_lea.vmem %s1, %s243
        %p245 = pneg %p91
        %p246 = pneg %p88
        %p247 = pneg %p112
        %p248 = pneg %p109
        %p249 = pneg %p133
        %p250 = pneg %p130
        %p251 = pneg %p161
        %p252 = pneg %p158
        %s253 = sand.u32 %s148, 1
        %s254 = scalar_lea.sflag [#allocation5], %s253
        %s255 = sand.u32 %s148, 1
        %s256 = smul.addr %s255, 8
        %s257 = scalar_lea.vmem [#allocation6], %s256
        %s258 = smul.u32 16, %s28
        %p259 = scmp.lt.s32.totalorder %s28, 0
        %s260 = scalar_select %p259, %s28, 0
        %s261 = smul.addr %s260, 8
        %s262 = scalar_lea.vmem %s1, %s261
        %p263 = scmp.eq.s32.totalorder %s28, 0
        // Predicated region
        $region41: #{tpu_custom_call.1} parent=35 // pred_check
          %p264 = pneg %p263
        $region42: #{tpu_custom_call.1} parent=35 // pred_check_branch
          %266 = sbr.rel (%p264) target = $region44
        $region43: #{tpu_custom_call.1} parent=35 // pred_region
          %267 = vst [vmem:[#allocation2] sm:$0xff] 0.0
        $region44: #{tpu_custom_call.1} parent=35 // pred_fallthru
          _
        %v268 = vld [vmem:[#allocation2] sm:$0xff]
        %v269 = vld [vmem:[%s262] sm:$0xff]
        %v270 = vld [vmem:[%s229] sm:$0xff]
        %v271 = vld [vmem:[%s229 + $0x8] sm:$0xff]
        %v272 = vld [vmem:[%s229 + $0x10] sm:$0xff]
        %v273 = vld [vmem:[%s229 + $0x18] sm:$0xff]
        %v274 = vld [vmem:[%s229 + $0x20] sm:$0xff]
        %v275 = vld [vmem:[%s229 + $0x28] sm:$0xff]
        %v276 = vld [vmem:[%s229 + $0x30] sm:$0xff]
        %v277 = vld [vmem:[%s229 + $0x38] sm:$0xff]
        %v278 = vld [vmem:[%s229 + $0x40] sm:$0xff]
        %v279 = vld [vmem:[%s229 + $0x48] sm:$0xff]
        %v280 = vld [vmem:[%s229 + $0x50] sm:$0xff]
        %v281 = vld [vmem:[%s229 + $0x58] sm:$0xff]
        %v282 = vld [vmem:[%s229 + $0x60] sm:$0xff]
        %v283 = vld [vmem:[%s229 + $0x68] sm:$0xff]
        %v284 = vld [vmem:[%s229 + $0x70] sm:$0xff]
        %v285 = vld [vmem:[%s229 + $0x78] sm:$0xff]
        %286 = vmatprep.subr.mxu0 0.0
        %287 = vmatpush1.msra.mxu0 %v285
        %288 = vmatprep.subr.mxu0 0.0
        %289 = vmatpush1.msra.mxu0 %v284
        %290 = vmatprep.subr.mxu0 0.0
        %291 = vmatpush1.msra.mxu0 %v283
        %292 = vmatprep.subr.mxu0 0.0
        %293 = vmatpush1.msra.mxu0 %v282
        %294 = vmatprep.subr.mxu0 0.0
        %295 = vmatpush1.msra.mxu0 %v281
        %296 = vmatprep.subr.mxu0 0.0
        %297 = vmatpush1.msra.mxu0 %v280
        %298 = vmatprep.subr.mxu0 0.0
        %299 = vmatpush1.msra.mxu0 %v279
        %300 = vmatprep.subr.mxu0 0.0
        %301 = vmatpush1.msra.mxu0 %v278
        %302 = vmatprep.subr.mxu0 0.0
        %303 = vmatpush1.msra.mxu0 %v277
        %304 = vmatprep.subr.mxu0 0.0
        %305 = vmatpush1.msra.mxu0 %v276
        %306 = vmatprep.subr.mxu0 0.0
        %307 = vmatpush1.msra.mxu0 %v275
        %308 = vmatprep.subr.mxu0 0.0
        %309 = vmatpush1.msra.mxu0 %v274
        %310 = vmatprep.subr.mxu0 0.0
        %311 = vmatpush1.msra.mxu0 %v273
        %312 = vmatprep.subr.mxu0 0.0
        %313 = vmatpush1.msra.mxu0 %v272
        %314 = vmatprep.subr.mxu0 0.0
        %315 = vmatpush1.msra.mxu0 %v271
        %316 = vmatprep.subr.mxu0 0.0
        %317 = vmatpush1.msra.mxu0 %v270
        %318 = vmatprep.subr.mxu0 0.0
        %319 = vmatpush2.msra.mxu0 0.0
        %320 = vmatprep.subr.mxu0 0.0
        %321 = vmatpush2.msra.mxu0 0.0
        %322 = vmatprep.subr.mxu0 0.0
        %323 = vmatpush2.msra.mxu0 0.0
        %324 = vmatprep.subr.mxu0 0.0
        %325 = vmatpush2.msra.mxu0 0.0
        %326 = vmatprep.subr.mxu0 0.0
        %327 = vmatpush2.msra.mxu0 0.0
        %328 = vmatprep.subr.mxu0 0.0
        %329 = vmatpush2.msra.mxu0 0.0
        %330 = vmatprep.subr.mxu0 0.0
        %331 = vmatpush2.msra.mxu0 0.0
        %332 = vmatprep.subr.mxu0 0.0
        %333 = vmatpush2.msra.mxu0 0.0
        %334 = vmatprep.subr.mxu0 0.0
        %335 = vmatpush2.msra.mxu0 0.0
        %336 = vmatprep.subr.mxu0 0.0
        %337 = vmatpush2.msra.mxu0 0.0
        %338 = vmatprep.subr.mxu0 0.0
        %339 = vmatpush2.msra.mxu0 0.0
        %340 = vmatprep.subr.mxu0 0.0
        %341 = vmatpush2.msra.mxu0 0.0
        %342 = vmatprep.subr.mxu0 0.0
        %343 = vmatpush2.msra.mxu0 0.0
        %344 = vmatprep.subr.mxu0 0.0
        %345 = vmatpush2.msra.mxu0 0.0
        %346 = vmatprep.subr.mxu0 0.0
        %347 = vmatpush2.msra.mxu0 0.0
        %348 = vmatprep.subr.mxu0 0.0
        %349 = vmatpush2.msra.mxu0 0.0
        %350 = vmatprep.mubr.f32.mxu0 0.0
        %351 = vmatmul.mubr.f32.gmra.mxu0 %v269
        %v352 = vpop.f32.mrf.mxu0
        %v353 = vadd.f32 0.0, %v352
        %v354 = vpop.f32.mrf.mxu0
        %355 = vdwg.mxu0
        %v356 = vadd.f32 %v268, %v353
        %357 = vst [vmem:[#allocation2] sm:$0xff] %v356
        // Predicated region
        $region45: #{tpu_custom_call.1} parent=35 // pred_check
          %p358 = pneg %p263
        $region46: #{tpu_custom_call.1} parent=35 // pred_check_branch
          %360 = sbr.rel (%p358) target = $region48
        $region47: #{tpu_custom_call.1} parent=35 // pred_region
          %v361 = vld [vmem:[#allocation2] sm:$0xff]
          %v362 = vld [vmem:[%s2] sm:$0xff]
          %364 = vset.pattern.permute.xlu0 0
          %365 = vperm.xlu0 %364, %v362
          %v366 = vpop.permute.xlu0 %365
          %v368 = vmul.f32 %v361, %v366
          %v369 = vld [vmem:[%s3] sm:$0xff]
          %371 = vset.pattern.permute.xlu0 0
          %372 = vperm.xlu0 %371, %v369
          %v373 = vpop.permute.xlu0 %372
          %v375 = vadd.f32 %v368, %v373
          %v376 = vmax.f32 %v375, 0.0
          %377 = vst [vmem:[%s257] sm:$0xff] %v376
        $region48: #{tpu_custom_call.1} parent=35 // pred_fallthru
          _
        %s378 = sand.u32 %s148, 1
        %s379 = scalar_lea.sflag [#allocation5], %s378
        %s380 = sand.u32 %s148, 1
        %s381 = smul.addr %s380, 8
        %s382 = scalar_lea.vmem [#allocation6], %s381
        // Predicated region
        $region49: #{tpu_custom_call.1} parent=35 // pred_check
          %p383 = pneg %p158
        $region50: #{tpu_custom_call.1} parent=35 // pred_check_branch
          %385 = sbr.rel (%p383) target = $region52
        $region51: #{tpu_custom_call.1} parent=35 // pred_region
          %s387 = ssub.s32 128, 128
          %388 = vsyncadd %s379, %s387
          %s389 = smul.addr %s26, 2
          %s390 = sadd.s32 %s27, %s389
          %s391 = smul.addr %s390, 128
          %s392 = scalar_lea.hbm %s4, %s391
          %s394 = sshll.u32 %s382, 4
          %s395 = int_to_ptr.vmem [resolvable:$true] %s394
          %397 = dma.vmem_to_hbm [thread:$0]  %s395, 128, %s392, %s379
        $region52: #{tpu_custom_call.1} parent=35 // pred_fallthru
          _
      $region36: #{tpu_custom_call.1} parent=5 // pred_fallthru
        _
      %p398 = scmp.le.s32.totalorder 2, %s16
      // Predicated region
      $region53: #{tpu_custom_call.1} parent=5 // pred_check
        %p399 = pneg %p398
      $region54: #{tpu_custom_call.1} parent=5 // pred_check_branch
        %401 = sbr.rel (%p399) target = $region56
      $region55: #{tpu_custom_call.1} parent=5 // pred_region
        %s402 = ssub.s32 %s16, 2
        // Predicated region
        $region57: #{tpu_custom_call.1} parent=55 // pred_check
          %p403 = pneg %p164
        $region58: #{tpu_custom_call.1} parent=55 // pred_check_branch
          %405 = sbr.rel (%p403) target = $region60
        $region59: #{tpu_custom_call.1} parent=55 // pred_region
          %s406 = sand.u32 %s149, 1
          %s407 = scalar_lea.sflag [#allocation5], %s406
          %s408 = sand.u32 %s149, 1
          %s409 = smul.addr %s408, 8
          %s410 = scalar_lea.vmem [#allocation6], %s409
          %411 = dma.done %s407, 128
        $region60: #{tpu_custom_call.1} parent=55 // pred_fallthru
          _
      $region56: #{tpu_custom_call.1} parent=5 // pred_fallthru
        _
    $region6: #{tpu_custom_call.1} parent=1 // loop_footer
      %s20 = sadd.s32 1, %s16
    $region7: #{tpu_custom_call.1} parent=1 // loop_footer_branch
      %15 = sbr.rel target = $region3
    $region8: #{tpu_custom_call.1} parent=1 // loop_exit
      _
    %412 = vsyncpa [#allocation4], 1
    %s413 = scalar_lea.sflag [#allocation4], 1
    %414 = vsyncpa %s413, 1
    %415 = vsyncpa [#allocation5], 1
    %s416 = scalar_lea.sflag [#allocation5], 1
    %417 = vsyncpa %s416, 1

// kernel: tpu_custom_call.1
$region0: #{tpu_custom_call.1}
  #allocation0 [shape = 'u32[]', space=smem, size = 0x4, offset = 0x4, fixed_abs, tag = 'smem constant byte address 0x4 - core index']
  #allocation1 [shape = 'u32[144,128]{1,0:T(1,128)}', space=vmem, size = 0x12000, scoped, tag = 'internal scratch']
  #allocation2 [shape = 'f32[8,128]{1,0:T(8,128)}', space=vmem, size = 0x1000, scoped, tag = 'scratch operand']
  %s0 = inlined_call_operand.hbm [shape: f32[2,128,256], index: 0, kind: input, shape index: {}]
  %s1 = inlined_call_operand.vmem [shape: f32[8,128], index: 1, kind: input, shape index: {}]
  %s2 = inlined_call_operand.vmem [shape: f32[8,1], index: 2, kind: input, shape index: {}]
  %s3 = inlined_call_operand.vmem [shape: f32[8,1], index: 3, kind: input, shape index: {}]
  %s4 = inlined_call_operand.hbm [shape: f32[2,8,256], index: 4, kind: output, shape index: {}]
  %s5 = sld [smem:[#allocation0]]
  $region61: #{tpu_custom_call.1} parent=0
    _
  %s7 = ssub.s32 1, %s5
  %s8 = scalar_select 0, %s7, %s5
  $region1: #{tpu_custom_call.1} parent=0
    #allocation3 [shape = 'u8[131072]{0}', space=vmem, size = 0x20000, scoped, tag = 'input window, operand 0']
    #allocation4 [shape = 's32[2]{0}', space=sflag, size = 0x8, scoped, tag = 'scoped memory for tpu_custom_call.1']
    #allocation5 [shape = 's32[2]{0}', space=sflag, size = 0x8, scoped, tag = 'scoped memory for tpu_custom_call.1']
    #allocation6 [shape = 'u8[8192]{0}', space=vmem, size = 0x2000, scoped, tag = 'output window, operand 0']
    %9 = vsyncpa [#allocation4], 0
    %s10 = scalar_lea.sflag [#allocation4], 1
    %11 = vsyncpa %s10, 0
    %12 = vsyncpa [#allocation5], 0
    %s13 = scalar_lea.sflag [#allocation5], 1
    %14 = vsyncpa %s13, 0
    loop: start=0, step=1, limit=6
    $region2: #{tpu_custom_call.1} parent=1 // loop_pre_header
      _
    $region3: #{tpu_custom_call.1} parent=1 // loop_header
      %s16 = sphi 0, %s20
      %p17 = scmp.ge.s32.totalorder %s16, 6
      %s23 = sphi 0, %s42
      %s24 = sphi 0, %s38
      %s25 = sphi 0, %s34
      %s26 = sphi 0, %s23
      %s27 = sphi 0, %s24
      %s28 = sphi 0, %s25
      %s29 = sphi 0, %s26
      %s30 = sphi 0, %s27
      %s31 = sphi 0, %s28
      %s49 = sphi 0, %s51
      %s52 = sphi 0, %s49
      %s53 = sphi 0, %s52
      %s69 = sphi 0, %s53
      %s75 = sphi 0, %s77
      %s78 = sphi 0, %s75
      %s79 = sphi 0, %s78
      %s95 = sphi 0, %s79
      %s99 = sphi 0, %s99
      %s101 = sphi 0, %s99
      %s102 = sphi 0, %s101
      %s116 = sphi 0, %s102
      %s120 = sphi 0, %s120
      %s122 = sphi 0, %s120
      %s123 = sphi 0, %s122
      %s137 = sphi 0, %s123
      %s145 = sphi 0, %s147
      %s148 = sphi 0, %s145
      %s149 = sphi 0, %s148
      %s165 = sphi 0, %s149
    $region4: #{tpu_custom_call.1} parent=1 // loop_header_branch
      %19 = sbr.rel (%p17) target = $region8
    $region5: #{tpu_custom_call.1} parent=1 // loop_body
      %s21 = ssub.s32 %s16, 1
      %s22 = ssub.s32 %s16, 2
      %s32 = sadd.s32 1, %s25
      %p33 = scmp.ge.s32.totalorder %s32, 1
      %s34 = scalar_select %p33, 0, %s32
      %s35 = sadd.s32 1, %s24
      %s36 = scalar_select %p33, %s35, %s24
      %p37 = scmp.ge.s32.totalorder %s36, 2
      %s38 = scalar_select %p37, 0, %s36
      %s39 = sadd.s32 1, %s23
      %s40 = scalar_select %p37, %s39, %s23
      %p41 = scmp.ge.s32.totalorder %s40, 2
      %s42 = scalar_select %p41, 0, %s40
      %s43 = ssub.s32 %s23, %s42
      %s44 = ssub.s32 %s25, %s34
      %s45 = sor.u32 %s43, %s44
      %s46 = ssub.s32 %s24, %s38
      %s47 = sor.u32 %s45, %s46
      %p48 = scmp.eq.s32.totalorder %s47, 0
      %s50 = sadd.s32 %s49, 1
      %s51 = scalar_select %p48, %s49, %s50
      %p54 = pneg %p48
      %p55 = scmp.eq.s32.totalorder %s16, 3
      %p56 = por %p54, %p55
      %p57 = scmp.ne.s32.totalorder %s49, %s52
      %p58 = scmp.eq.s32.totalorder %s16, 0
      %p59 = por %p57, %p58
      %p60 = scmp.ne.s32.totalorder %s49, %s52
      %p61 = scmp.eq.s32.totalorder %s21, 3
      %p62 = por %p60, %p61
      %p63 = scmp.ne.s32.totalorder %s52, %s53
      %p64 = scmp.eq.s32.totalorder %s21, 0
      %p65 = por %p63, %p64
      %p66 = scmp.ne.s32.totalorder %s52, %s53
      %p67 = scmp.eq.s32.totalorder %s22, 3
      %p68 = por %p66, %p67
      %p70 = scmp.ne.s32.totalorder %s53, %s69
      %p71 = scmp.eq.s32.totalorder %s22, 0
      %p72 = por %p70, %p71
      %s73 = ssub.s32 %s25, %s34
      %p74 = scmp.eq.s32.totalorder %s73, 0
      %s76 = sadd.s32 %s75, 1
      %s77 = scalar_select %p74, %s75, %s76
      %p80 = pneg %p74
      %p81 = scmp.eq.s32.totalorder %s16, 3
      %p82 = por %p80, %p81
      %p83 = scmp.ne.s32.totalorder %s75, %s78
      %p84 = scmp.eq.s32.totalorder %s16, 0
      %p85 = por %p83, %p84
      %p86 = scmp.ne.s32.totalorder %s75, %s78
      %p87 = scmp.eq.s32.totalorder %s21, 3
      %p88 = por %p86, %p87
      %p89 = scmp.ne.s32.totalorder %s78, %s79
      %p90 = scmp.eq.s32.totalorder %s21, 0
      %p91 = por %p89, %p90
      %p92 = scmp.ne.s32.totalorder %s78, %s79
      %p93 = scmp.eq.s32.totalorder %s22, 3
      %p94 = por %p92, %p93
      %p96 = scmp.ne.s32.totalorder %s79, %s95
      %p97 = scmp.eq.s32.totalorder %s22, 0
      %p98 = por %p96, %p97
      %s100 = sadd.s32 %s99, 1
      %p103 = scmp.eq.s32.totalorder %s16, 3
      %p104 = scmp.ne.s32.totalorder %s99, %s101
      %p105 = scmp.eq.s32.totalorder %s16, 0
      %p106 = por %p104, %p105
      %p107 = scmp.ne.s32.totalorder %s99, %s101
      %p108 = scmp.eq.s32.totalorder %s21, 3
      %p109 = por %p107, %p108
      %p110 = scmp.ne.s32.totalorder %s101, %s102
      %p111 = scmp.eq.s32.totalorder %s21, 0
      %p112 = por %p110, %p111
      %p113 = scmp.ne.s32.totalorder %s101, %s102
      %p114 = scmp.eq.s32.totalorder %s22, 3
      %p115 = por %p113, %p114
      %p117 = scmp.ne.s32.totalorder %s102, %s116
      %p118 = scmp.eq.s32.totalorder %s22, 0
      %p119 = por %p117, %p118
      %s121 = sadd.s32 %s120, 1
      %p124 = scmp.eq.s32.totalorder %s16, 3
      %p125 = scmp.ne.s32.totalorder %s120, %s122
      %p126 = scmp.eq.s32.totalorder %s16, 0
      %p127 = por %p125, %p126
      %p128 = scmp.ne.s32.totalorder %s120, %s122
      %p129 = scmp.eq.s32.totalorder %s21, 3
      %p130 = por %p128, %p129
      %p131 = scmp.ne.s32.totalorder %s122, %s123
      %p132 = scmp.eq.s32.totalorder %s21, 0
      %p133 = por %p131, %p132
      %p134 = scmp.ne.s32.totalorder %s122, %s123
      %p135 = scmp.eq.s32.totalorder %s22, 3
      %p136 = por %p134, %p135
      %p138 = scmp.ne.s32.totalorder %s123, %s137
      %p139 = scmp.eq.s32.totalorder %s22, 0
      %p140 = por %p138, %p139
      %s141 = ssub.s32 %s23, %s42
      %s142 = ssub.s32 %s24, %s38
      %s143 = sor.u32 %s141, %s142
      %p144 = scmp.eq.s32.totalorder %s143, 0
      %s146 = sadd.s32 %s145, 1
      %s147 = scalar_select %p144, %s145, %s146
      %p150 = pneg %p144
      %p151 = scmp.eq.s32.totalorder %s16, 3
      %p152 = por %p150, %p151
      %p153 = scmp.ne.s32.totalorder %s145, %s148
      %p154 = scmp.eq.s32.totalorder %s16, 0
      %p155 = por %p153, %p154
      %p156 = scmp.ne.s32.totalorder %s145, %s148
      %p157 = scmp.eq.s32.totalorder %s21, 3
      %p158 = por %p156, %p157
      %p159 = scmp.ne.s32.totalorder %s148, %s149
      %p160 = scmp.eq.s32.totalorder %s21, 0
      %p161 = por %p159, %p160
      %p162 = scmp.ne.s32.totalorder %s148, %s149
      %p163 = scmp.eq.s32.totalorder %s22, 3
      %p164 = por %p162, %p163
      %p166 = scmp.ne.s32.totalorder %s149, %s165
      %p167 = scmp.eq.s32.totalorder %s22, 0
      %p168 = por %p166, %p167
      %p169 = scmp.le.s32.totalorder 1, %s16
      %p170 = scmp.lt.s32.totalorder %s16, 5
      %p171 = pnand %p169, %p170
      %p172 = pneg %p171
      // Predicated region
      $region9: #{tpu_custom_call.1} parent=5 // pred_check
        _
      $region10: #{tpu_custom_call.1} parent=5 // pred_check_branch
        %174 = sbr.rel (%p171) target = $region12
      $region11: #{tpu_custom_call.1} parent=5 // pred_region
        %s175 = ssub.s32 %s16, 1
        // Predicated region
        $region13: #{tpu_custom_call.1} parent=11 // pred_check
          %p176 = pneg %p91
        $region14: #{tpu_custom_call.1} parent=11 // pred_check_branch
          %178 = sbr.rel (%p176) target = $region16
        $region15: #{tpu_custom_call.1} parent=11 // pred_region
          %p179 = scmp.lt.s32.totalorder %s28, 0
          %s180 = scalar_select %p179, %s28, 0
          %s181 = smul.addr %s180, 8
          %s182 = scalar_lea.vmem %s1, %s181
        $region16: #{tpu_custom_call.1} parent=11 // pred_fallthru
          _
        // Predicated region
        $region17: #{tpu_custom_call.1} parent=11 // pred_check
          %p183 = pneg %p112
        $region18: #{tpu_custom_call.1} parent=11 // pred_check_branch
          %185 = sbr.rel (%p183) target = $region20
        $region19: #{tpu_custom_call.1} parent=11 // pred_region
          _
        $region20: #{tpu_custom_call.1} parent=11 // pred_fallthru
          _
        // Predicated region
        $region21: #{tpu_custom_call.1} parent=11 // pred_check
          %p186 = pneg %p133
        $region22: #{tpu_custom_call.1} parent=11 // pred_check_branch
          %188 = sbr.rel (%p186) target = $region24
        $region23: #{tpu_custom_call.1} parent=11 // pred_region
          _
        $region24: #{tpu_custom_call.1} parent=11 // pred_fallthru
          _
      $region12: #{tpu_custom_call.1} parent=5 // pred_fallthru
        _
      %p189 = scmp.lt.s32.totalorder %s16, 4
      // Predicated region
      $region25: #{tpu_custom_call.1} parent=5 // pred_check
        %p190 = pneg %p189
      $region26: #{tpu_custom_call.1} parent=5 // pred_check_branch
        %192 = sbr.rel (%p190) target = $region28
      $region27: #{tpu_custom_call.1} parent=5 // pred_region
        // Predicated region
        $region29: #{tpu_custom_call.1} parent=27 // pred_check
          %p193 = pneg %p59
        $region30: #{tpu_custom_call.1} parent=27 // pred_check_branch
          %195 = sbr.rel (%p193) target = $region32
        $region31: #{tpu_custom_call.1} parent=27 // pred_region
          %s196 = sand.u32 %s49, 1
          %s197 = scalar_lea.sflag [#allocation4], %s196
          %s198 = sand.u32 %s49, 1
          %s199 = smul.addr %s198, 128
          %s200 = scalar_lea.vmem [#allocation3], %s199
          %s201 = smul.u32 16, %s25
          %s203 = ssub.s32 2048, 2048
          %204 = vsyncadd %s197, %s203
          %s205 = smul.addr %s201, 2
          %s206 = sadd.s32 %s24, %s205
          %s207 = smul.addr %s23, 32
          %s208 = sadd.s32 %s206, %s207
          %s209 = smul.addr %s208, 128
          %s210 = scalar_lea.hbm %s0, %s209
          %s211 = sshll.u32 %s200, 4
          %s212 = int_to_ptr.vmem [resolvable:$true] %s211
          %217 = dma.hbm_to_vmem [thread:$0]  %s210, 2048, %s212, %s197, 256, 128, 8
        $region32: #{tpu_custom_call.1} parent=27 // pred_fallthru
          _
      $region28: #{tpu_custom_call.1} parent=5 // pred_fallthru
        _
      %p218 = scmp.le.s32.totalorder 1, %s16
      %p219 = scmp.lt.s32.totalorder %s16, 5
      %p220 = pnand %p218, %p219
      %p221 = pneg %p220
      // Predicated region
      $region33: #{tpu_custom_call.1} parent=5 // pred_check
        _
      $region34: #{tpu_custom_call.1} parent=5 // pred_check_branch
        %223 = sbr.rel (%p220) target = $region36
      $region35: #{tpu_custom_call.1} parent=5 // pred_region
        %s224 = ssub.s32 %s16, 1
        %s225 = sand.u32 %s52, 1
        %s226 = scalar_lea.sflag [#allocation4], %s225
        %s227 = sand.u32 %s52, 1
        %s228 = smul.addr %s227, 128
        %s229 = scalar_lea.vmem [#allocation3], %s228
        // Predicated region
        $region37: #{tpu_custom_call.1} parent=35 // pred_check
          %p230 = pneg %p65
        $region38: #{tpu_custom_call.1} parent=35 // pred_check_branch
          %232 = sbr.rel (%p230) target = $region40
        $region39: #{tpu_custom_call.1} parent=35 // pred_region
          %233 = dma.done %s226, 2048
        $region40: #{tpu_custom_call.1} parent=35 // pred_fallthru
          _
        %s234 = sand.u32 %s52, 1
        %s235 = scalar_lea.sflag [#allocation4], %s234
        %s236 = sand.u32 %s52, 1
        %s237 = smul.addr %s236, 128
        %s238 = scalar_lea.vmem [#allocation3], %s237
        %p239 = pneg %p65
        %p240 = pneg %p62
        %p241 = scmp.lt.s32.totalorder %s28, 0
        %s242 = scalar_select %p241, %s28, 0
        %s243 = smul.addr %s242, 8
        %s244 = scalar_lea.vmem %s1, %s243
        %p245 = pneg %p91
        %p246 = pneg %p88
        %p247 = pneg %p112
        %p248 = pneg %p109
        %p249 = pneg %p133
        %p250 = pneg %p130
        %p251 = pneg %p161
        %p252 = pneg %p158
        %s253 = sand.u32 %s148, 1
        %s254 = scalar_lea.sflag [#allocation5], %s253
        %s255 = sand.u32 %s148, 1
        %s256 = smul.addr %s255, 8
        %s257 = scalar_lea.vmem [#allocation6], %s256
        %s258 = smul.u32 16, %s28
        %p259 = scmp.lt.s32.totalorder %s28, 0
        %s260 = scalar_select %p259, %s28, 0
        %s261 = smul.addr %s260, 8
        %s262 = scalar_lea.vmem %s1, %s261
        %p263 = scmp.eq.s32.totalorder %s28, 0
        // Predicated region
        $region41: #{tpu_custom_call.1} parent=35 // pred_check
          %p264 = pneg %p263
        $region42: #{tpu_custom_call.1} parent=35 // pred_check_branch
          %266 = sbr.rel (%p264) target = $region44
        $region43: #{tpu_custom_call.1} parent=35 // pred_region
          %267 = vst [vmem:[#allocation2] sm:$0xff] 0.0
        $region44: #{tpu_custom_call.1} parent=35 // pred_fallthru
          _
        %v268 = vld [vmem:[#allocation2] sm:$0xff]
        %v269 = vld [vmem:[%s262] sm:$0xff]
        %v270 = vld [vmem:[%s229] sm:$0xff]
        %v271 = vld [vmem:[%s229 + $0x8] sm:$0xff]
        %v272 = vld [vmem:[%s229 + $0x10] sm:$0xff]
        %v273 = vld [vmem:[%s229 + $0x18] sm:$0xff]
        %v274 = vld [vmem:[%s229 + $0x20] sm:$0xff]
        %v275 = vld [vmem:[%s229 + $0x28] sm:$0xff]
        %v276 = vld [vmem:[%s229 + $0x30] sm:$0xff]
        %v277 = vld [vmem:[%s229 + $0x38] sm:$0xff]
        %v278 = vld [vmem:[%s229 + $0x40] sm:$0xff]
        %v279 = vld [vmem:[%s229 + $0x48] sm:$0xff]
        %v280 = vld [vmem:[%s229 + $0x50] sm:$0xff]
        %v281 = vld [vmem:[%s229 + $0x58] sm:$0xff]
        %v282 = vld [vmem:[%s229 + $0x60] sm:$0xff]
        %v283 = vld [vmem:[%s229 + $0x68] sm:$0xff]
        %v284 = vld [vmem:[%s229 + $0x70] sm:$0xff]
        %v285 = vld [vmem:[%s229 + $0x78] sm:$0xff]
        %286 = vmatprep.subr.mxu0 0.0
        %287 = vmatpush1.msra.mxu0 %v285
        %288 = vmatprep.subr.mxu0 0.0
        %289 = vmatpush1.msra.mxu0 %v284
        %290 = vmatprep.subr.mxu0 0.0
        %291 = vmatpush1.msra.mxu0 %v283
        %292 = vmatprep.subr.mxu0 0.0
        %293 = vmatpush1.msra.mxu0 %v282
        %294 = vmatprep.subr.mxu0 0.0
        %295 = vmatpush1.msra.mxu0 %v281
        %296 = vmatprep.subr.mxu0 0.0
        %297 = vmatpush1.msra.mxu0 %v280
        %298 = vmatprep.subr.mxu0 0.0
        %299 = vmatpush1.msra.mxu0 %v279
        %300 = vmatprep.subr.mxu0 0.0
        %301 = vmatpush1.msra.mxu0 %v278
        %302 = vmatprep.subr.mxu0 0.0
        %303 = vmatpush1.msra.mxu0 %v277
        %304 = vmatprep.subr.mxu0 0.0
        %305 = vmatpush1.msra.mxu0 %v276
        %306 = vmatprep.subr.mxu0 0.0
        %307 = vmatpush1.msra.mxu0 %v275
        %308 = vmatprep.subr.mxu0 0.0
        %309 = vmatpush1.msra.mxu0 %v274
        %310 = vmatprep.subr.mxu0 0.0
        %311 = vmatpush1.msra.mxu0 %v273
        %312 = vmatprep.subr.mxu0 0.0
        %313 = vmatpush1.msra.mxu0 %v272
        %314 = vmatprep.subr.mxu0 0.0
        %315 = vmatpush1.msra.mxu0 %v271
        %316 = vmatprep.subr.mxu0 0.0
        %317 = vmatpush1.msra.mxu0 %v270
        %318 = vmatprep.subr.mxu0 0.0
        %319 = vmatpush2.msra.mxu0 0.0
        %320 = vmatprep.subr.mxu0 0.0
        %321 = vmatpush2.msra.mxu0 0.0
        %322 = vmatprep.subr.mxu0 0.0
        %323 = vmatpush2.msra.mxu0 0.0
        %324 = vmatprep.subr.mxu0 0.0
        %325 = vmatpush2.msra.mxu0 0.0
        %326 = vmatprep.subr.mxu0 0.0
        %327 = vmatpush2.msra.mxu0 0.0
        %328 = vmatprep.subr.mxu0 0.0
        %329 = vmatpush2.msra.mxu0 0.0
        %330 = vmatprep.subr.mxu0 0.0
        %331 = vmatpush2.msra.mxu0 0.0
        %332 = vmatprep.subr.mxu0 0.0
        %333 = vmatpush2.msra.mxu0 0.0
        %334 = vmatprep.subr.mxu0 0.0
        %335 = vmatpush2.msra.mxu0 0.0
        %336 = vmatprep.subr.mxu0 0.0
        %337 = vmatpush2.msra.mxu0 0.0
        %338 = vmatprep.subr.mxu0 0.0
        %339 = vmatpush2.msra.mxu0 0.0
        %340 = vmatprep.subr.mxu0 0.0
        %341 = vmatpush2.msra.mxu0 0.0
        %342 = vmatprep.subr.mxu0 0.0
        %343 = vmatpush2.msra.mxu0 0.0
        %344 = vmatprep.subr.mxu0 0.0
        %345 = vmatpush2.msra.mxu0 0.0
        %346 = vmatprep.subr.mxu0 0.0
        %347 = vmatpush2.msra.mxu0 0.0
        %348 = vmatprep.subr.mxu0 0.0
        %349 = vmatpush2.msra.mxu0 0.0
        %350 = vmatprep.mubr.f32.mxu0 0.0
        %351 = vmatmul.mubr.f32.gmra.mxu0 %v269
        %v352 = vpop.f32.mrf.mxu0
        %v353 = vadd.f32 0.0, %v352
        %v354 = vpop.f32.mrf.mxu0
        %355 = vdwg.mxu0
        %v356 = vadd.f32 %v268, %v353
        %357 = vst [vmem:[#allocation2] sm:$0xff] %v356
        // Predicated region
        $region45: #{tpu_custom_call.1} parent=35 // pred_check
          %p358 = pneg %p263
        $region46: #{tpu_custom_call.1} parent=35 // pred_check_branch
          %360 = sbr.rel (%p358) target = $region48
        $region47: #{tpu_custom_call.1} parent=35 // pred_region
          %v361 = vld [vmem:[#allocation2] sm:$0xff]
          %v362 = vld [vmem:[%s2] sm:$0xff]
          %364 = vset.pattern.permute.xlu0 0
          %365 = vperm.xlu0 %364, %v362
          %v366 = vpop.permute.xlu0 %365
          %v368 = vmul.f32 %v361, %v366
          %v369 = vld [vmem:[%s3] sm:$0xff]
          %371 = vset.pattern.permute.xlu0 0
          %372 = vperm.xlu0 %371, %v369
          %v373 = vpop.permute.xlu0 %372
          %v375 = vadd.f32 %v368, %v373
          %v376 = vmax.f32 %v375, 0.0
          %377 = vst [vmem:[%s257] sm:$0xff] %v376
        $region48: #{tpu_custom_call.1} parent=35 // pred_fallthru
          _
        %s378 = sand.u32 %s148, 1
        %s379 = scalar_lea.sflag [#allocation5], %s378
        %s380 = sand.u32 %s148, 1
        %s381 = smul.addr %s380, 8
        %s382 = scalar_lea.vmem [#allocation6], %s381
        // Predicated region
        $region49: #{tpu_custom_call.1} parent=35 // pred_check
          %p383 = pneg %p158
        $region50: #{tpu_custom_call.1} parent=35 // pred_check_branch
          %385 = sbr.rel (%p383) target = $region52
        $region51: #{tpu_custom_call.1} parent=35 // pred_region
          %s387 = ssub.s32 128, 128
          %388 = vsyncadd %s379, %s387
          %s389 = smul.addr %s26, 2
          %s390 = sadd.s32 %s27, %s389
          %s391 = smul.addr %s390, 128
          %s392 = scalar_lea.hbm %s4, %s391
          %s394 = sshll.u32 %s382, 4
          %s395 = int_to_ptr.vmem [resolvable:$true] %s394
          %397 = dma.vmem_to_hbm [thread:$0]  %s395, 128, %s392, %s379
        $region52: #{tpu_custom_call.1} parent=35 // pred_fallthru
          _
      $region36: #{tpu_custom_call.1} parent=5 // pred_fallthru
        _
      %p398 = scmp.le.s32.totalorder 2, %s16
      // Predicated region
      $region53: #{tpu_custom_call.1} parent=5 // pred_check
        %p399 = pneg %p398
      $region54: #{tpu_custom_call.1} parent=5 // pred_check_branch
        %401 = sbr.rel (%p399) target = $region56
      $region55: #{tpu_custom_call.1} parent=5 // pred_region
        %s402 = ssub.s32 %s16, 2
        // Predicated region
        $region57: #{tpu_custom_call.1} parent=55 // pred_check
          %p403 = pneg %p164
        $region58: #{tpu_custom_call.1} parent=55 // pred_check_branch
          %405 = sbr.rel (%p403) target = $region60
        $region59: #{tpu_custom_call.1} parent=55 // pred_region
          %s406 = sand.u32 %s149, 1
          %s407 = scalar_lea.sflag [#allocation5], %s406
          %s408 = sand.u32 %s149, 1
          %s409 = smul.addr %s408, 8
          %s410 = scalar_lea.vmem [#allocation6], %s409
          %411 = dma.done %s407, 128
        $region60: #{tpu_custom_call.1} parent=55 // pred_fallthru
          _
      $region56: #{tpu_custom_call.1} parent=5 // pred_fallthru
        _
    $region6: #{tpu_custom_call.1} parent=1 // loop_footer
      %s20 = sadd.s32 1, %s16
    $region7: #{tpu_custom_call.1} parent=1 // loop_footer_branch
      %15 = sbr.rel target = $region3
    $region8: #{tpu_custom_call.1} parent=1 // loop_exit
      _
    %412 = vsyncpa [#allocation4], 1
    %s413 = scalar_lea.sflag [#allocation4], 1
    %414 = vsyncpa %s413, 1
    %415 = vsyncpa [#allocation5], 1
    %s416 = scalar_lea.sflag [#allocation5], 1
    %417 = vsyncpa %s416, 1

</llo_original>
